<compile_context>
chip_gen: v6e
topology: v6e:2x2x1
jax: 0.10.0
libtpu: 0.0.40
codegen_flags: <defaults>
</compile_context>

<pallas_src>
import math

import jax
import jax.numpy as jnp
from jax.experimental import pallas as pl
from jax.experimental.pallas import tpu as pltpu


def _bert_embedding_kernel(ids_ref, tab_ref, out_ref):
    bt, tS, n = ids_ref.shape          # (batch_tile, seq_tile, n_streams)
    _, D = tab_ref.shape               # (Vpad, d_model)
    M = bt * tS

    # ---- multi-hot gather: ONE (M, Vpad) x (Vpad, D) MXU matmul ----------
    ids = ids_ref[...].reshape(M, n)                                   # (M, 7) int32
    vocab_iota = jax.lax.broadcasted_iota(jnp.int32, (M, tab_ref.shape[0]), 1)
    multi_hot = (ids[:, 0:1] == vocab_iota).astype(jnp.float32)
    for j in range(1, n):                                              # static, VPU compares
        multi_hot += (ids[:, j:j + 1] == vocab_iota).astype(jnp.float32)
    emb = jnp.dot(multi_hot, tab_ref[...],
                  preferred_element_type=jnp.float32)                  # (M, D)

    # ---- positional embedding: one sin() per element (EUP) ----------------
    # pe[p, 2k]   = sin(p * exp(-2k * ln(10000)/D))
    # pe[p, 2k+1] = cos(...) = sin(... + pi/2)
    lane = jax.lax.broadcasted_iota(jnp.int32, (1, D), 1)
    even = (lane & ~1).astype(jnp.float32)                             # 2k for lanes 2k, 2k+1
    parity = (lane & 1).astype(jnp.float32)
    inv_freq = jnp.exp(even * (-math.log(10000.0) / D))                # (1, D)
    phase = parity * (math.pi / 2.0)
    pos = (jax.lax.broadcasted_iota(jnp.int32, (tS, 1), 0)
           + pl.program_id(1) * tS).astype(jnp.float32)                # (tS, 1)
    pe = jnp.sin(pos * inv_freq + phase)                               # (tS, D)

    acc = emb.reshape(bt, tS, D) + pe[None]                            # (bt, tS, D)
    # out_ref is either (bt, tS, D) or the lane-dense repack (bt, tS*D/128, 128)
    out_ref[...] = acc.reshape(out_ref.shape).astype(out_ref.dtype)


def bert_embedding(id_seqs, tables, *, seq_tile=None, batch_tile=None,
                   max_len=512, out_dtype=jnp.float32):
    """Fused BERTEmbedding forward (eval mode).

    id_seqs: sequence of 7 int32 arrays, each (B, S)
    tables:  sequence of 7 float32 embedding tables, each (vocab_i, D)
    returns: (B, S, D) out_dtype == token + itype + ... + eflags + PE
    """
    id_seqs, tables = tuple(id_seqs), tuple(tables)
    n = len(tables)
    assert len(id_seqs) == n and n >= 1
    B, S = id_seqs[0].shape
    D = int(tables[0].shape[1])
    assert S <= max_len, "sequence longer than max_len"
    assert D % 2 == 0, "d_model must be even (as in the PyTorch module)"

    # --- concatenate vocabs into one table; pad K up to a 128-lane multiple ---
    vocab_sizes = [int(t.shape[0]) for t in tables]
    sum_v = sum(vocab_sizes)
    v_pad = max(128, -(-sum_v // 128) * 128)
    table_cat = jnp.concatenate([t.astype(jnp.float32) for t in tables], axis=0)
    table_cat = jnp.pad(table_cat, ((0, v_pad - sum_v), (0, 0)))

    # --- pack the 7 id streams into one (B, S, n) tensor with vocab offsets ---
    offsets = [0]
    for v in vocab_sizes[:-1]:
        offsets.append(offsets[-1] + v)
    ids_packed = jnp.stack(
        [jnp.asarray(s, jnp.int32) + off for s, off in zip(id_seqs, offsets)],
        axis=-1)                                                       # (B, S, n)

    # --- tiling: >=2 parallel grid steps when possible; <=~8 MiB out block ----
    if seq_tile is None:
        seq_tile = S if S <= 512 else 512
    seq_tile = min(seq_tile, S)
    n_seq = pl.cdiv(S, seq_tile)
    out_itemsize = jnp.dtype(out_dtype).itemsize
    if batch_tile is None:
        row_bytes = seq_tile * D * out_itemsize
        batch_tile = max(1, min(B, (8 << 20) // max(1, row_bytes)))
        # guarantee >=2 grid steps (megacore on v7x + pipelined writeback)
        while batch_tile > 1 and pl.cdiv(B, batch_tile) * n_seq < 2:
            batch_tile = (batch_tile + 1) // 2
    batch_tile = max(1, min(batch_tile, B))
    n_batch = pl.cdiv(B, batch_tile)
    grid = (n_batch, n_seq)

    # --- lane-dense output layout when D is not a multiple of 128 -------------
    repack = (D % 128 != 0 and 128 % D == 0 and (seq_tile * D) % 128 == 0
              and S % seq_tile == 0)
    if repack:
        r_blk = seq_tile * D // 128
        r_tot = S * D // 128
        repack = (r_blk % 8 == 0) or (r_blk == r_tot)
    if repack:
        out_shape = jax.ShapeDtypeStruct((B, r_tot, 128), out_dtype)
        out_spec = pl.BlockSpec((batch_tile, r_blk, 128), lambda b, s: (b, s, 0))
    else:
        out_shape = jax.ShapeDtypeStruct((B, S, D), out_dtype)
        out_spec = pl.BlockSpec((batch_tile, seq_tile, D), lambda b, s: (b, s, 0))

    ids_spec = pl.BlockSpec((batch_tile, seq_tile, n), lambda b, s: (b, s, 0))
    # Constant index map -> the table is DMA'd once and stays resident in VMEM.
    tab_spec = pl.BlockSpec((v_pad, D), lambda b, s: (0, 0))

    # per-step VMEM: double-buffered ids (lane-padded to 128) + output + table.
    vmem_bytes = (2 * batch_tile * seq_tile * D * out_itemsize
                  + 2 * batch_tile * seq_tile * 128 * 4
                  + 2 * v_pad * D * 4
                  + (4 << 20))                                          # margin
    vmem_limit = int(min(max(vmem_bytes, 16 << 20), 64 << 20))

    out = pl.pallas_call(
        _bert_embedding_kernel,
        out_shape=out_shape,
        grid_spec=pltpu.PrefetchScalarGridSpec(
            num_scalar_prefetch=0,
            grid=grid,
            in_specs=[ids_spec, tab_spec],
            out_specs=out_spec,
        ),
        compiler_params=pltpu.CompilerParams(
            dimension_semantics=("parallel", "parallel"),
            vmem_limit_bytes=vmem_limit,
        ),
    )(ids_packed, table_cat)

    if repack:
        out = out.reshape(B, S, D)      # free metadata reshape in HBM
    return out


def _reference(id_seqs, tables, d_model, max_len=512):
    """Pure-JAX port of the PyTorch BERTEmbedding forward (eval mode)."""
    B, S = id_seqs[0].shape
    position = jnp.arange(0, max_len, dtype=jnp.float32)[:, None]
    div_term = jnp.exp(jnp.arange(0, d_model, 2, dtype=jnp.float32)
                       * (-math.log(10000.0) / d_model))
    pe = jnp.zeros((max_len, d_model), jnp.float32)
    pe = pe.at[:, 0::2].set(jnp.sin(position * div_term))
    pe = pe.at[:, 1::2].set(jnp.cos(position * div_term))
    x = pe[None, :S, :]
    for ids, tab in zip(id_seqs, tables):
        x = x + tab[ids]
    return x  # dropout in eval mode is the identity


if __name__ == "__main__":
    key = jax.random.PRNGKey(0)
    batch, seq_len, embed_size = 2, 8, 128   # D multiple of 128 -> lane-dense output
    vocab_sizes = {
        "token_vocab": 50, "itype_vocab": 12, "opnd_type_vocab": 9,
        "reg_id_vocab": 20, "reg_r_vocab": 6, "reg_w_vocab": 6,
        "eflags_vocab": 10,
    }
    names = list(vocab_sizes)
    keys = jax.random.split(key, 2 * len(names))

    tables, id_seqs = [], []
    for i, name in enumerate(names):
        V = vocab_sizes[name]
        w = jax.random.normal(keys[2 * i], (V, embed_size), jnp.float32)
        w = w.at[0].set(0.0)                 # padding_idx=0 row is zero
        # Snap to bf16-representable f32 so the MXU one-hot gather (default
        # matmul precision == bf16 operand rounding) is bit-exact; see the
        # accuracy note at the top of the file.
        w = w.astype(jnp.bfloat16).astype(jnp.float32)
        tables.append(w)
        id_seqs.append(jax.random.randint(
            keys[2 * i + 1], (batch, seq_len), 0, V, dtype=jnp.int32))

    out = bert_embedding(id_seqs, tables)
    out = jax.block_until_ready(out)

    ref = _reference(id_seqs, tables, embed_size)
    assert out.shape == (batch, seq_len, embed_size), out.shape
    assert out.dtype == jnp.float32
    max_err = float(jnp.max(jnp.abs(out - ref)))
    assert jnp.allclose(out, ref, atol=1e-4, rtol=1e-4), f"mismatch: {max_err}"

    print("KERNEL_OK")
</pallas_src>

<mosaic_0001>
module attributes {stable_mosaic.version = 11 : i64} {
  func.func @_bert_embedding_kernel(%arg0: i32, %arg1: i32, %arg2: memref<1x8x7xi32, #tpu.memory_space<vmem>>, %arg3: memref<128x128xf32, #tpu.memory_space<vmem>>, %arg4: memref<1x8x128xf32, #tpu.memory_space<vmem>>) attributes {dimension_semantics = [#tpu.dimension_semantics<parallel>, #tpu.dimension_semantics<parallel>], iteration_bounds = array<i64: 2, 1>, scalar_prefetch = 0 : i64, scratch_operands = 0 : i64, tpu.core_type = #tpu.core_type<tc>, window_params = [{transform_indices = @transform_0, window_bounds = array<i64: 1, 8, 7>}, {pipeline_mode = #tpu.pipeline_mode<synchronous>, transform_indices = @transform_1, window_bounds = array<i64: 128, 128>}, {transform_indices = @transform_2, window_bounds = array<i64: 1, 8, 128>}]} {
    %c0 = arith.constant 0 : index
    %c0_0 = arith.constant 0 : index
    %c0_1 = arith.constant 0 : index
    %0 = vector.load %arg2[%c0, %c0_0, %c0_1] : memref<1x8x7xi32, #tpu.memory_space<vmem>>, vector<1x8x7xi32>
    %1 = vector.shape_cast %0 : vector<1x8x7xi32> to vector<8x7xi32>
    %2 = tpu.iota {dimensions = array<i32: 1>} : vector<8x128xi32>
    %3 = vector.extract_strided_slice %1 {offsets = [0, 0], sizes = [8, 1], strides = [1, 1]} : vector<8x7xi32> to vector<8x1xi32>
    %4 = vector.broadcast %3 : vector<8x1xi32> to vector<8x128xi32>
    %5 = arith.cmpi eq, %4, %2 : vector<8x128xi32>
    %6 = arith.extui %5 : vector<8x128xi1> to vector<8x128xi32>
    %7 = arith.sitofp %6 : vector<8x128xi32> to vector<8x128xf32>
    %8 = vector.extract_strided_slice %1 {offsets = [0, 1], sizes = [8, 1], strides = [1, 1]} : vector<8x7xi32> to vector<8x1xi32>
    %9 = vector.broadcast %8 : vector<8x1xi32> to vector<8x128xi32>
    %10 = arith.cmpi eq, %9, %2 : vector<8x128xi32>
    %11 = arith.extui %10 : vector<8x128xi1> to vector<8x128xi32>
    %12 = arith.sitofp %11 : vector<8x128xi32> to vector<8x128xf32>
    %13 = arith.addf %7, %12 : vector<8x128xf32>
    %14 = vector.extract_strided_slice %1 {offsets = [0, 2], sizes = [8, 1], strides = [1, 1]} : vector<8x7xi32> to vector<8x1xi32>
    %15 = vector.broadcast %14 : vector<8x1xi32> to vector<8x128xi32>
    %16 = arith.cmpi eq, %15, %2 : vector<8x128xi32>
    %17 = arith.extui %16 : vector<8x128xi1> to vector<8x128xi32>
    %18 = arith.sitofp %17 : vector<8x128xi32> to vector<8x128xf32>
    %19 = arith.addf %13, %18 : vector<8x128xf32>
    %20 = vector.extract_strided_slice %1 {offsets = [0, 3], sizes = [8, 1], strides = [1, 1]} : vector<8x7xi32> to vector<8x1xi32>
    %21 = vector.broadcast %20 : vector<8x1xi32> to vector<8x128xi32>
    %22 = arith.cmpi eq, %21, %2 : vector<8x128xi32>
    %23 = arith.extui %22 : vector<8x128xi1> to vector<8x128xi32>
    %24 = arith.sitofp %23 : vector<8x128xi32> to vector<8x128xf32>
    %25 = arith.addf %19, %24 : vector<8x128xf32>
    %26 = vector.extract_strided_slice %1 {offsets = [0, 4], sizes = [8, 1], strides = [1, 1]} : vector<8x7xi32> to vector<8x1xi32>
    %27 = vector.broadcast %26 : vector<8x1xi32> to vector<8x128xi32>
    %28 = arith.cmpi eq, %27, %2 : vector<8x128xi32>
    %29 = arith.extui %28 : vector<8x128xi1> to vector<8x128xi32>
    %30 = arith.sitofp %29 : vector<8x128xi32> to vector<8x128xf32>
    %31 = arith.addf %25, %30 : vector<8x128xf32>
    %32 = vector.extract_strided_slice %1 {offsets = [0, 5], sizes = [8, 1], strides = [1, 1]} : vector<8x7xi32> to vector<8x1xi32>
    %33 = vector.broadcast %32 : vector<8x1xi32> to vector<8x128xi32>
    %34 = arith.cmpi eq, %33, %2 : vector<8x128xi32>
    %35 = arith.extui %34 : vector<8x128xi1> to vector<8x128xi32>
    %36 = arith.sitofp %35 : vector<8x128xi32> to vector<8x128xf32>
    %37 = arith.addf %31, %36 : vector<8x128xf32>
    %38 = vector.extract_strided_slice %1 {offsets = [0, 6], sizes = [8, 1], strides = [1, 1]} : vector<8x7xi32> to vector<8x1xi32>
    %39 = vector.broadcast %38 : vector<8x1xi32> to vector<8x128xi32>
    %40 = arith.cmpi eq, %39, %2 : vector<8x128xi32>
    %41 = arith.extui %40 : vector<8x128xi1> to vector<8x128xi32>
    %42 = arith.sitofp %41 : vector<8x128xi32> to vector<8x128xf32>
    %43 = arith.addf %37, %42 : vector<8x128xf32>
    %c0_2 = arith.constant 0 : index
    %c0_3 = arith.constant 0 : index
    %44 = vector.load %arg3[%c0_2, %c0_3] : memref<128x128xf32, #tpu.memory_space<vmem>>, vector<128x128xf32>
    %cst = arith.constant dense<0.000000e+00> : vector<8x128xf32>
    %45 = tpu.matmul %43, %44, %cst {dimension_numbers = #tpu.dot_dimension_numbers<[1], [0], [0], [1], [0, 0, 1, 1], [], []>} : vector<8x128xf32>, vector<128x128xf32>, vector<8x128xf32> -> vector<8x128xf32>
    %46 = tpu.iota {dimensions = array<i32: 1>} : vector<1x128xi32>
    %c-2_i32 = arith.constant -2 : i32
    %47 = vector.broadcast %c-2_i32 : i32 to vector<1x128xi32>
    %48 = arith.andi %46, %47 : vector<1x128xi32>
    %49 = arith.sitofp %48 : vector<1x128xi32> to vector<1x128xf32>
    %c1_i32 = arith.constant 1 : i32
    %50 = vector.broadcast %c1_i32 : i32 to vector<1x128xi32>
    %51 = arith.andi %46, %50 : vector<1x128xi32>
    %52 = arith.sitofp %51 : vector<1x128xi32> to vector<1x128xf32>
    %cst_4 = arith.constant -0.0719557852 : f32
    %53 = vector.broadcast %cst_4 : f32 to vector<1x128xf32>
    %54 = arith.mulf %49, %53 : vector<1x128xf32>
    %55 = math.exp %54 : vector<1x128xf32>
    %cst_5 = arith.constant 1.57079637 : f32
    %56 = vector.broadcast %cst_5 : f32 to vector<1x128xf32>
    %57 = arith.mulf %52, %56 : vector<1x128xf32>
    %58 = tpu.iota {dimensions = array<i32: 0>} : vector<8x1xi32>
    %c8_i32 = arith.constant 8 : i32
    %59 = arith.muli %arg1, %c8_i32 : i32
    %60 = vector.broadcast %59 : i32 to vector<8x1xi32>
    %61 = arith.addi %58, %60 : vector<8x1xi32>
    %62 = arith.sitofp %61 : vector<8x1xi32> to vector<8x1xf32>
    %63 = vector.broadcast %62 : vector<8x1xf32> to vector<8x128xf32>
    %64 = vector.broadcast %55 : vector<1x128xf32> to vector<8x128xf32>
    %65 = arith.mulf %63, %64 : vector<8x128xf32>
    %66 = vector.broadcast %57 : vector<1x128xf32> to vector<8x128xf32>
    %67 = arith.addf %65, %66 : vector<8x128xf32>
    %68 = math.sin %67 : vector<8x128xf32>
    %69 = vector.shape_cast %45 : vector<8x128xf32> to vector<1x8x128xf32>
    %70 = vector.shape_cast %68 : vector<8x128xf32> to vector<1x8x128xf32>
    %71 = arith.addf %69, %70 : vector<1x8x128xf32>
    %c0_6 = arith.constant 0 : index
    %c0_7 = arith.constant 0 : index
    %c0_8 = arith.constant 0 : index
    %72 = vector.load %arg4[%c0_6, %c0_7, %c0_8] : memref<1x8x128xf32, #tpu.memory_space<vmem>>, vector<1x8x128xf32>
    tpu.vector_store %arg4[%c0_6, %c0_7, %c0_8], %71 {strides = array<i32>} : memref<1x8x128xf32, #tpu.memory_space<vmem>>, vector<1x8x128xf32>,
    return
  }
  func.func @transform_0(%arg0: i32, %arg1: i32) -> (i32, i32, i32) {
    %c0_i32 = arith.constant 0 : i32
    %c0_i32_0 = arith.constant 0 : i32
    return %arg0, %arg1, %c0_i32 : i32, i32, i32
  }
  func.func @transform_1(%arg0: i32, %arg1: i32) -> (i32, i32) {
    %c0_i32 = arith.constant 0 : i32
    %c0_i32_0 = arith.constant 0 : i32
    %c0_i32_1 = arith.constant 0 : i32
    return %c0_i32, %c0_i32_0 : i32, i32
  }
  func.func @transform_2(%arg0: i32, %arg1: i32) -> (i32, i32, i32) {
    %c0_i32 = arith.constant 0 : i32
    %c0_i32_0 = arith.constant 0 : i32
    return %arg0, %arg1, %c0_i32 : i32, i32, i32
  }
}

</mosaic_0001>

<llo_original>
// kernel: tpu_custom_call.1
$region0: #{tpu_custom_call.1}
  #allocation0 [shape = 'u32[]', space=smem, size = 0x4, offset = 0x4, fixed_abs, tag = 'smem constant byte address 0x4 - core index']
  #allocation1 [shape = 'u32[144,128]{1,0:T(1,128)}', space=vmem, size = 0x12000, scoped, tag = 'internal scratch']
  %s0 = inlined_call_operand.vmem [shape: s32[2,8,7], index: 0, kind: input, shape index: {}]
  %s1 = inlined_call_operand.hbm [shape: f32[128,128], index: 1, kind: input, shape index: {}]
  %s2 = inlined_call_operand.hbm [shape: f32[2,8,128], index: 2, kind: output, shape index: {}]
  %s3 = sld [smem:[#allocation0]]
  $region45: #{tpu_custom_call.1} parent=0
    _
  %s5 = ssub.s32 1, %s3
  %s6 = scalar_select 0, %s5, %s3
  $region1: #{tpu_custom_call.1} parent=0
    #allocation2 [shape = 'u8[65536]{0}', space=vmem, size = 0x10000, scoped, tag = 'input window, operand 1, single buffered']
    #allocation3 [shape = 's32[2]{0}', space=sflag, size = 0x8, scoped, tag = 'scoped memory for tpu_custom_call.1']
    #allocation4 [shape = 's32[2]{0}', space=sflag, size = 0x8, scoped, tag = 'scoped memory for tpu_custom_call.1']
    #allocation5 [shape = 'u8[8192]{0}', space=vmem, size = 0x2000, scoped, tag = 'output window, operand 0']
    %7 = vsyncpa [#allocation3], 0
    %8 = vsyncpa [#allocation4], 0
    %s9 = scalar_lea.sflag [#allocation4], 1
    %10 = vsyncpa %s9, 0
    loop: start=0, step=1, limit=4
    $region2: #{tpu_custom_call.1} parent=1 // loop_pre_header
      _
    $region3: #{tpu_custom_call.1} parent=1 // loop_header
      %s12 = sphi 0, %s16
      %p13 = scmp.ge.s32.totalorder %s12, 4
      %s19 = sphi 0, %s31
      %s20 = sphi 0, %s27
      %s21 = sphi 0, %s19
      %s22 = sphi 0, %s20
      %s23 = sphi 0, %s21
      %s24 = sphi 0, %s22
      %s36 = sphi 0, %s38
      %s39 = sphi 0, %s36
      %s40 = sphi 0, %s39
      %s56 = sphi 0, %s40
      %s60 = sphi 0, %s60
      %s62 = sphi 0, %s60
      %s63 = sphi 0, %s62
      %s77 = sphi 0, %s63
      %s85 = sphi 0, %s87
      %s88 = sphi 0, %s85
      %s89 = sphi 0, %s88
      %s105 = sphi 0, %s89
    $region4: #{tpu_custom_call.1} parent=1 // loop_header_branch
      %15 = sbr.rel (%p13) target = $region8
    $region5: #{tpu_custom_call.1} parent=1 // loop_body
      %s17 = ssub.s32 %s12, 1
      %s18 = ssub.s32 %s12, 2
      %s25 = sadd.s32 1, %s20
      %p26 = scmp.ge.s32.totalorder %s25, 1
      %s27 = scalar_select %p26, 0, %s25
      %s28 = sadd.s32 1, %s19
      %s29 = scalar_select %p26, %s28, %s19
      %p30 = scmp.ge.s32.totalorder %s29, 2
      %s31 = scalar_select %p30, 0, %s29
      %s32 = ssub.s32 %s19, %s31
      %s33 = ssub.s32 %s20, %s27
      %s34 = sor.u32 %s32, %s33
      %p35 = scmp.eq.s32.totalorder %s34, 0
      %s37 = sadd.s32 %s36, 1
      %s38 = scalar_select %p35, %s36, %s37
      %p41 = pneg %p35
      %p42 = scmp.eq.s32.totalorder %s12, 1
      %p43 = por %p41, %p42
      %p44 = scmp.ne.s32.totalorder %s36, %s39
      %p45 = scmp.eq.s32.totalorder %s12, 0
      %p46 = por %p44, %p45
      %p47 = scmp.ne.s32.totalorder %s36, %s39
      %p48 = scmp.eq.s32.totalorder %s17, 1
      %p49 = por %p47, %p48
      %p50 = scmp.ne.s32.totalorder %s39, %s40
      %p51 = scmp.eq.s32.totalorder %s17, 0
      %p52 = por %p50, %p51
      %p53 = scmp.ne.s32.totalorder %s39, %s40
      %p54 = scmp.eq.s32.totalorder %s18, 1
      %p55 = por %p53, %p54
      %p57 = scmp.ne.s32.totalorder %s40, %s56
      %p58 = scmp.eq.s32.totalorder %s18, 0
      %p59 = por %p57, %p58
      %s61 = sadd.s32 %s60, 1
      %p64 = scmp.eq.s32.totalorder %s12, 1
      %p65 = scmp.ne.s32.totalorder %s60, %s62
      %p66 = scmp.eq.s32.totalorder %s12, 0
      %p67 = por %p65, %p66
      %p68 = scmp.ne.s32.totalorder %s60, %s62
      %p69 = scmp.eq.s32.totalorder %s17, 1
      %p70 = por %p68, %p69
      %p71 = scmp.ne.s32.totalorder %s62, %s63
      %p72 = scmp.eq.s32.totalorder %s17, 0
      %p73 = por %p71, %p72
      %p74 = scmp.ne.s32.totalorder %s62, %s63
      %p75 = scmp.eq.s32.totalorder %s18, 1
      %p76 = por %p74, %p75
      %p78 = scmp.ne.s32.totalorder %s63, %s77
      %p79 = scmp.eq.s32.totalorder %s18, 0
      %p80 = por %p78, %p79
      %s81 = ssub.s32 %s19, %s31
      %s82 = ssub.s32 %s20, %s27
      %s83 = sor.u32 %s81, %s82
      %p84 = scmp.eq.s32.totalorder %s83, 0
      %s86 = sadd.s32 %s85, 1
      %s87 = scalar_select %p84, %s85, %s86
      %p90 = pneg %p84
      %p91 = scmp.eq.s32.totalorder %s12, 1
      %p92 = por %p90, %p91
      %p93 = scmp.ne.s32.totalorder %s85, %s88
      %p94 = scmp.eq.s32.totalorder %s12, 0
      %p95 = por %p93, %p94
      %p96 = scmp.ne.s32.totalorder %s85, %s88
      %p97 = scmp.eq.s32.totalorder %s17, 1
      %p98 = por %p96, %p97
      %p99 = scmp.ne.s32.totalorder %s88, %s89
      %p100 = scmp.eq.s32.totalorder %s17, 0
      %p101 = por %p99, %p100
      %p102 = scmp.ne.s32.totalorder %s88, %s89
      %p103 = scmp.eq.s32.totalorder %s18, 1
      %p104 = por %p102, %p103
      %p106 = scmp.ne.s32.totalorder %s89, %s105
      %p107 = scmp.eq.s32.totalorder %s18, 0
      %p108 = por %p106, %p107
      %p109 = scmp.le.s32.totalorder 1, %s12
      %p110 = scmp.lt.s32.totalorder %s12, 3
      %p111 = pnand %p109, %p110
      %p112 = pneg %p111
      // Predicated region
      $region9: #{tpu_custom_call.1} parent=5 // pred_check
        _
      $region10: #{tpu_custom_call.1} parent=5 // pred_check_branch
        %114 = sbr.rel (%p111) target = $region12
      $region11: #{tpu_custom_call.1} parent=5 // pred_region
        %s115 = ssub.s32 %s12, 1
        // Predicated region
        $region13: #{tpu_custom_call.1} parent=11 // pred_check
          %p116 = pneg %p73
        $region14: #{tpu_custom_call.1} parent=11 // pred_check_branch
          %118 = sbr.rel (%p116) target = $region16
        $region15: #{tpu_custom_call.1} parent=11 // pred_region
          %s120 = ssub.s32 2048, 2048
          %121 = vsyncadd [#allocation3], %s120
          %s122 = sshll.u32 [#allocation2], 4
          %s123 = int_to_ptr.vmem [resolvable:$true] %s122
          %128 = dma.hbm_to_vmem [thread:$0]  %s1, 2048, %s123, [#allocation3], 128, 128, 8
        $region16: #{tpu_custom_call.1} parent=11 // pred_fallthru
          _
      $region12: #{tpu_custom_call.1} parent=5 // pred_fallthru
        _
      %p129 = scmp.lt.s32.totalorder %s12, 2
      // Predicated region
      $region17: #{tpu_custom_call.1} parent=5 // pred_check
        %p130 = pneg %p129
      $region18: #{tpu_custom_call.1} parent=5 // pred_check_branch
        %132 = sbr.rel (%p130) target = $region20
      $region19: #{tpu_custom_call.1} parent=5 // pred_region
        // Predicated region
        $region21: #{tpu_custom_call.1} parent=19 // pred_check
          %p133 = pneg %p46
        $region22: #{tpu_custom_call.1} parent=19 // pred_check_branch
          %135 = sbr.rel (%p133) target = $region24
        $region23: #{tpu_custom_call.1} parent=19 // pred_region
          %p136 = scmp.lt.s32.totalorder %s19, 1
          %s137 = scalar_select %p136, %s19, 1
          %p138 = scmp.lt.s32.totalorder %s20, 0
          %s139 = scalar_select %p138, %s20, 0
          %s140 = sadd.s32 %s139, %s137
          %s141 = smul.addr %s140, 8
          %s142 = scalar_lea.vmem %s0, %s141
        $region24: #{tpu_custom_call.1} parent=19 // pred_fallthru
          _
      $region20: #{tpu_custom_call.1} parent=5 // pred_fallthru
        _
      %p143 = scmp.le.s32.totalorder 1, %s12
      %p144 = scmp.lt.s32.totalorder %s12, 3
      %p145 = pnand %p143, %p144
      %p146 = pneg %p145
      // Predicated region
      $region25: #{tpu_custom_call.1} parent=5 // pred_check
        _
      $region26: #{tpu_custom_call.1} parent=5 // pred_check_branch
        %148 = sbr.rel (%p145) target = $region28
      $region27: #{tpu_custom_call.1} parent=5 // pred_region
        %s149 = ssub.s32 %s12, 1
        // Predicated region
        $region29: #{tpu_custom_call.1} parent=27 // pred_check
          %p150 = pneg %p73
        $region30: #{tpu_custom_call.1} parent=27 // pred_check_branch
          %152 = sbr.rel (%p150) target = $region32
        $region31: #{tpu_custom_call.1} parent=27 // pred_region
          %153 = dma.done [#allocation3], 2048
        $region32: #{tpu_custom_call.1} parent=27 // pred_fallthru
          _
        %p154 = scmp.lt.s32.totalorder %s21, 1
        %s155 = scalar_select %p154, %s21, 1
        %p156 = scmp.lt.s32.totalorder %s22, 0
        %s157 = scalar_select %p156, %s22, 0
        %s158 = sadd.s32 %s157, %s155
        %s159 = smul.addr %s158, 8
        %s160 = scalar_lea.vmem %s0, %s159
        %p161 = pneg %p52
        %p162 = pneg %p49
        %p163 = pneg %p73
        %p164 = pneg %p70
        %p165 = pneg %p101
        %p166 = pneg %p98
        %s167 = sand.u32 %s88, 1
        %s168 = scalar_lea.sflag [#allocation4], %s167
        %s169 = sand.u32 %s88, 1
        %s170 = smul.addr %s169, 8
        %s171 = scalar_lea.vmem [#allocation5], %s170
        %p172 = scmp.lt.s32.totalorder %s21, 1
        %s173 = scalar_select %p172, %s21, 1
        %p174 = scmp.lt.s32.totalorder %s22, 0
        %s175 = scalar_select %p174, %s22, 0
        %s176 = sadd.s32 %s175, %s173
        %s177 = smul.addr %s176, 8
        %s178 = scalar_lea.vmem %s0, %s177
        %v179 = vld [vmem:[%s178] sm:$0xff]
        %v180 = vlaneseq
        %v181 = vand.u32 %v180, 127
        %182 = vset.pattern.permute.xlu0 0
        %183 = vperm.xlu0 %182, %v179
        %v184 = vpop.permute.xlu0 %183
        %vm185 = vcmp.eq.s32.totalorder %v184, %v181
        %v186 = vsel %vm185, 1, 0
        %v187 = vcvt.s32.f32 %v186
        %188 = vset.pattern.permute.xlu0 1
        %189 = vperm.xlu0 %188, %v179
        %v190 = vpop.permute.xlu0 %189
        %vm191 = vcmp.eq.s32.totalorder %v190, %v181
        %v192 = vsel %vm191, 1, 0
        %v193 = vcvt.s32.f32 %v192
        %v194 = vadd.f32 %v187, %v193
        %195 = vset.pattern.permute.xlu0 2
        %196 = vperm.xlu0 %195, %v179
        %v197 = vpop.permute.xlu0 %196
        %vm198 = vcmp.eq.s32.totalorder %v197, %v181
        %v199 = vsel %vm198, 1, 0
        %v200 = vcvt.s32.f32 %v199
        %v201 = vadd.f32 %v194, %v200
        %202 = vset.pattern.permute.xlu0 3
        %203 = vperm.xlu0 %202, %v179
        %v204 = vpop.permute.xlu0 %203
        %vm205 = vcmp.eq.s32.totalorder %v204, %v181
        %v206 = vsel %vm205, 1, 0
        %v207 = vcvt.s32.f32 %v206
        %v208 = vadd.f32 %v201, %v207
        %209 = vset.pattern.permute.xlu0 4
        %210 = vperm.xlu0 %209, %v179
        %v211 = vpop.permute.xlu0 %210
        %vm212 = vcmp.eq.s32.totalorder %v211, %v181
        %v213 = vsel %vm212, 1, 0
        %v214 = vcvt.s32.f32 %v213
        %v215 = vadd.f32 %v208, %v214
        %216 = vset.pattern.permute.xlu0 5
        %217 = vperm.xlu0 %216, %v179
        %v218 = vpop.permute.xlu0 %217
        %vm219 = vcmp.eq.s32.totalorder %v218, %v181
        %v220 = vsel %vm219, 1, 0
        %v221 = vcvt.s32.f32 %v220
        %v222 = vadd.f32 %v215, %v221
        %223 = vset.pattern.permute.xlu0 6
        %224 = vperm.xlu0 %223, %v179
        %v225 = vpop.permute.xlu0 %224
        %vm226 = vcmp.eq.s32.totalorder %v225, %v181
        %v227 = vsel %vm226, 1, 0
        %v228 = vcvt.s32.f32 %v227
        %v229 = vadd.f32 %v222, %v228
        %v230 = vld [vmem:[#allocation2] sm:$0xff]
        %v231 = vld [vmem:[#allocation2 + $0x8] sm:$0xff]
        %v232 = vld [vmem:[#allocation2 + $0x10] sm:$0xff]
        %v233 = vld [vmem:[#allocation2 + $0x18] sm:$0xff]
        %v234 = vld [vmem:[#allocation2 + $0x20] sm:$0xff]
        %v235 = vld [vmem:[#allocation2 + $0x28] sm:$0xff]
        %v236 = vld [vmem:[#allocation2 + $0x30] sm:$0xff]
        %v237 = vld [vmem:[#allocation2 + $0x38] sm:$0xff]
        %v238 = vld [vmem:[#allocation2 + $0x40] sm:$0xff]
        %v239 = vld [vmem:[#allocation2 + $0x48] sm:$0xff]
        %v240 = vld [vmem:[#allocation2 + $0x50] sm:$0xff]
        %v241 = vld [vmem:[#allocation2 + $0x58] sm:$0xff]
        %v242 = vld [vmem:[#allocation2 + $0x60] sm:$0xff]
        %v243 = vld [vmem:[#allocation2 + $0x68] sm:$0xff]
        %v244 = vld [vmem:[#allocation2 + $0x70] sm:$0xff]
        %v245 = vld [vmem:[#allocation2 + $0x78] sm:$0xff]
        %246 = vmatprep.subr.mxu0 0.0
        %247 = vmatpush1.msra.mxu0 %v245
        %248 = vmatprep.subr.mxu0 0.0
        %249 = vmatpush1.msra.mxu0 %v244
        %250 = vmatprep.subr.mxu0 0.0
        %251 = vmatpush1.msra.mxu0 %v243
        %252 = vmatprep.subr.mxu0 0.0
        %253 = vmatpush1.msra.mxu0 %v242
        %254 = vmatprep.subr.mxu0 0.0
        %255 = vmatpush1.msra.mxu0 %v241
        %256 = vmatprep.subr.mxu0 0.0
        %257 = vmatpush1.msra.mxu0 %v240
        %258 = vmatprep.subr.mxu0 0.0
        %259 = vmatpush1.msra.mxu0 %v239
        %260 = vmatprep.subr.mxu0 0.0
        %261 = vmatpush1.msra.mxu0 %v238
        %262 = vmatprep.subr.mxu0 0.0
        %263 = vmatpush1.msra.mxu0 %v237
        %264 = vmatprep.subr.mxu0 0.0
        %265 = vmatpush1.msra.mxu0 %v236
        %266 = vmatprep.subr.mxu0 0.0
        %267 = vmatpush1.msra.mxu0 %v235
        %268 = vmatprep.subr.mxu0 0.0
        %269 = vmatpush1.msra.mxu0 %v234
        %270 = vmatprep.subr.mxu0 0.0
        %271 = vmatpush1.msra.mxu0 %v233
        %272 = vmatprep.subr.mxu0 0.0
        %273 = vmatpush1.msra.mxu0 %v232
        %274 = vmatprep.subr.mxu0 0.0
        %275 = vmatpush1.msra.mxu0 %v231
        %276 = vmatprep.subr.mxu0 0.0
        %277 = vmatpush1.msra.mxu0 %v230
        %278 = vmatprep.subr.mxu0 0.0
        %279 = vmatpush2.msra.mxu0 0.0
        %280 = vmatprep.subr.mxu0 0.0
        %281 = vmatpush2.msra.mxu0 0.0
        %282 = vmatprep.subr.mxu0 0.0
        %283 = vmatpush2.msra.mxu0 0.0
        %284 = vmatprep.subr.mxu0 0.0
        %285 = vmatpush2.msra.mxu0 0.0
        %286 = vmatprep.subr.mxu0 0.0
        %287 = vmatpush2.msra.mxu0 0.0
        %288 = vmatprep.subr.mxu0 0.0
        %289 = vmatpush2.msra.mxu0 0.0
        %290 = vmatprep.subr.mxu0 0.0
        %291 = vmatpush2.msra.mxu0 0.0
        %292 = vmatprep.subr.mxu0 0.0
        %293 = vmatpush2.msra.mxu0 0.0
        %294 = vmatprep.subr.mxu0 0.0
        %295 = vmatpush2.msra.mxu0 0.0
        %296 = vmatprep.subr.mxu0 0.0
        %297 = vmatpush2.msra.mxu0 0.0
        %298 = vmatprep.subr.mxu0 0.0
        %299 = vmatpush2.msra.mxu0 0.0
        %300 = vmatprep.subr.mxu0 0.0
        %301 = vmatpush2.msra.mxu0 0.0
        %302 = vmatprep.subr.mxu0 0.0
        %303 = vmatpush2.msra.mxu0 0.0
        %304 = vmatprep.subr.mxu0 0.0
        %305 = vmatpush2.msra.mxu0 0.0
        %306 = vmatprep.subr.mxu0 0.0
        %307 = vmatpush2.msra.mxu0 0.0
        %308 = vmatprep.subr.mxu0 0.0
        %309 = vmatpush2.msra.mxu0 0.0
        %310 = vmatprep.mubr.f32.mxu0 0.0
        %311 = vmatmul.mubr.f32.gmra.mxu0 %v229
        %v312 = vpop.f32.mrf.mxu0
        %v313 = vadd.f32 0.0, %v312
        %v314 = vpop.f32.mrf.mxu0
        %315 = vdwg.mxu0
        %v316 = vand.u32 %v181, 4294967294
        %v317 = vcvt.s32.f32 %v316
        %v318 = vand.u32 %v181, 1
        %v319 = vcvt.s32.f32 %v318
        %v320 = vmul.f32 %v317, -0.071955785
        %v321 = vmul.f32 %v320, 1.442695
        %v322 = vpow.pop %v321
        %v323 = vmul.f32 %v319, 1.5707964
        %v324 = vlaneseq
        %v325 = vshrl.u32 %v324, 7
        %s326 = smul.u32 %s22, 8
        %v327 = vstv %s326
        %v328 = vadd.s32 %v325, %v327
        %v329 = vcvt.s32.f32 %v328
        %v330 = vmul.f32 %v329, %v322
        %v331 = vadd.f32 %v330, %v323
        %v332 = vand.u32 2147483647, %v331
        %vm333 = vcmp.le.f32.partialorder %v332, 0.7853982
        %vm334 = vcmp.lt.s32.totalorder %v331, 0
        %v335 = vand.u32 %v331, 2139095040
        %v336 = vshrl.u32 %v335, 23
        %v337 = vsub.s32 %v336, 127
        %v338 = vand.u32 2147483647, %v331
        %v339 = vand.u32 %v338, 8388607
        %v340 = vor.u32 %v339, 8388608
        %v341 = vsub.s32 0, %v340
        %v342 = vadd.s32 %v337, 1
        %vm343 = vcmp.gt.s32.totalorder %v342, 0
        %v344 = vsel %vm343, %v342, 0
        %v345 = vshrl.u32 %v344, 5
        %v346 = vand.u32 %v344, 31
        %v347 = vsub.s32 32, %v346
        %v348 = vshrl.u32 683565275, %v347
        %v349 = vshll.u32 683565275, %v346
        %v350 = vshrl.u32 2475754826, %v347
        %v351 = vor.u32 %v349, %v350
        %v352 = vshll.u32 2475754826, %v346
        %v353 = vshrl.u32 2131351028, %v347
        %v354 = vor.u32 %v352, %v353
        %v355 = vshll.u32 2131351028, %v346
        %v356 = vshrl.u32 2102212464, %v347
        %v357 = vor.u32 %v355, %v356
        %v358 = vshll.u32 2102212464, %v346
        %v359 = vshrl.u32 920167782, %v347
        %v360 = vor.u32 %v358, %v359
        %v361 = vshll.u32 920167782, %v346
        %v362 = vshrl.u32 1326507024, %v347
        %v363 = vor.u32 %v361, %v362
        %vm364 = vcmp.lt.s32.totalorder %v345, 1
        %vm365 = vcmp.lt.s32.totalorder %v345, 2
        %vm366 = vcmp.lt.s32.totalorder %v345, 3
        %vm367 = vcmp.lt.s32.totalorder %v345, 4
        %v368 = vsel %vm364, %v348, %v351
        %v369 = vsel %vm367, %v357, 2102212464
        %v370 = vsel %vm366, %v354, %v369
        %v371 = vsel %vm365, %v368, %v370
        %v372 = vsel %vm364, %v351, %v354
        %v373 = vsel %vm367, %v360, 920167782
        %v374 = vsel %vm366, %v357, %v373
        %v375 = vsel %vm365, %v372, %v374
        %v376 = vsel %vm364, %v354, %v357
        %v377 = vsel %vm367, %v363, 1326507024
        %v378 = vsel %vm366, %v360, %v377
        %v379 = vsel %vm365, %v376, %v378
        %v380 = vshll.u32 %v340, 8
        %v381 = vmul.u32.u64.compose %v380, %v379
        %v382 = vextract.low.u32 %v381
        %v383 = vextract.high.u32 %v381
        %v384 = vmul.u32.u64.compose %v380, %v375
        %v385 = vextract.low.u32 %v384
        %v386 = vextract.high.u32 %v384
        %v387 = vmul.u32 %v380, %v371
        %v388 = vadd.s32 %v383, %v385
        %vm389 = vc.u32 %v383, %v385
        %v390 = vadd.s32 %v386, 1
        %v391 = vsel %vm389, %v390, %v386
        %v392 = vadd.s32 %v387, %v391
        %v393 = vadd.s32 %v392, 536870912
        %v394 = vshrl.u32 %v393, 30
        %v395 = vshll.u32 %v394, 30
        %v396 = vsub.s32 %v392, %v395
        %vm397 = vcmp.lt.s32.totalorder %v396, 0
        %v398 = vsub.s32 0, %v396
        %v399 = vsel %vm397, %v398, %v396
        %v400 = vclz %v399
        %v401 = vsub.s32 %v400, 2
        %vm402 = vcmp.gt.s32.totalorder 0, %v401
        %v403 = vsel %vm402, 0, %v401
        %v404 = vsub.s32 32, %v403
        %v405 = vshll.u32 %v396, %v403
        %v406 = vshrl.u32 %v388, %v404
        %v407 = vor.u32 %v405, %v406
        %v408 = vsub.s32 4294967266, %v403
        %v409 = vadd.s32 %v408, 127
        %v410 = vshll.u32 %v409, 23
        %v411 = vor.u32 4788187, %v410
        %v412 = vand.u32 2147483647, %v411
        %v414 = vcvt.s32.f32 %v407
        %v415 = vmul.f32 %v414, %v412
        %v416 = vxor.u32 %v415, 2147483648
        %v417 = vsel %vm334, %v416, %v415
        %v418 = vsub.s32 4, %v394
        %v419 = vsel %vm334, %v418, %v394
        %v420 = vsel %vm333, %v331, %v417
        %v421 = vsel %vm333, 0, %v419
        %v422 = vcosq.f32.pop %v420
        %v423 = vsinq.f32.pop %v420
        %vm424 = vweird.f32 %v331
        %v425 = vadd.s32 %v421, 3
        %v426 = vand.u32 %v425, 3
        %vm427 = vcmp.lt.s32.totalorder %v426, 2
        %vm428 = vcmp.eq.s32.totalorder %v426, 0
        %v429 = vxor.u32 %v423, 2147483648
        %v430 = vsel %vm428, %v422, %v429
        %vm431 = vcmp.eq.s32.totalorder %v426, 2
        %v432 = vxor.u32 %v422, 2147483648
        %v433 = vsel %vm431, %v432, %v423
        %v434 = vsel %vm427, %v430, %v433
        %v435 = vsel %vm424, nan, %v434
        %v436 = vadd.f32 %v313, %v435
        %437 = vst [vmem:[%s171] sm:$0xff] %v436
        %s438 = sand.u32 %s88, 1
        %s439 = scalar_lea.sflag [#allocation4], %s438
        %s440 = sand.u32 %s88, 1
        %s441 = smul.addr %s440, 8
        %s442 = scalar_lea.vmem [#allocation5], %s441
        // Predicated region
        $region33: #{tpu_custom_call.1} parent=27 // pred_check
          %p443 = pneg %p98
        $region34: #{tpu_custom_call.1} parent=27 // pred_check_branch
          %445 = sbr.rel (%p443) target = $region36
        $region35: #{tpu_custom_call.1} parent=27 // pred_region
          %s447 = ssub.s32 128, 128
          %448 = vsyncadd %s439, %s447
          %s449 = sadd.s32 %s22, %s21
          %s450 = smul.addr %s449, 128
          %s451 = scalar_lea.hbm %s2, %s450
          %s453 = sshll.u32 %s442, 4
          %s454 = int_to_ptr.vmem [resolvable:$true] %s453
          %456 = dma.vmem_to_hbm [thread:$0]  %s454, 128, %s451, %s439
        $region36: #{tpu_custom_call.1} parent=27 // pred_fallthru
          _
      $region28: #{tpu_custom_call.1} parent=5 // pred_fallthru
        _
      %p457 = scmp.le.s32.totalorder 2, %s12
      // Predicated region
      $region37: #{tpu_custom_call.1} parent=5 // pred_check
        %p458 = pneg %p457
      $region38: #{tpu_custom_call.1} parent=5 // pred_check_branch
        %460 = sbr.rel (%p458) target = $region40
      $region39: #{tpu_custom_call.1} parent=5 // pred_region
        %s461 = ssub.s32 %s12, 2
        // Predicated region
        $region41: #{tpu_custom_call.1} parent=39 // pred_check
          %p462 = pneg %p104
        $region42: #{tpu_custom_call.1} parent=39 // pred_check_branch
          %464 = sbr.rel (%p462) target = $region44
        $region43: #{tpu_custom_call.1} parent=39 // pred_region
          %s465 = sand.u32 %s89, 1
          %s466 = scalar_lea.sflag [#allocation4], %s465
          %s467 = sand.u32 %s89, 1
          %s468 = smul.addr %s467, 8
          %s469 = scalar_lea.vmem [#allocation5], %s468
          %470 = dma.done %s466, 128
        $region44: #{tpu_custom_call.1} parent=39 // pred_fallthru
          _
      $region40: #{tpu_custom_call.1} parent=5 // pred_fallthru
        _
    $region6: #{tpu_custom_call.1} parent=1 // loop_footer
      %s16 = sadd.s32 1, %s12
    $region7: #{tpu_custom_call.1} parent=1 // loop_footer_branch
      %11 = sbr.rel target = $region3
    $region8: #{tpu_custom_call.1} parent=1 // loop_exit
      _
    %471 = vsyncpa [#allocation3], 1
    %s472 = scalar_lea.sflag [#allocation3], 1
    %473 = vsyncpa %s472, 1
    %474 = vsyncpa [#allocation4], 1
    %s475 = scalar_lea.sflag [#allocation4], 1
    %476 = vsyncpa %s475, 1

</llo_original>
